<compile_context>
chip_gen: v7x
topology: tpu7x:2x2x1
jax: 0.10.0
libtpu: 0.0.40
codegen_flags: <defaults>
</compile_context>

<pallas_src>
from functools import partial

import jax
import jax.numpy as jnp
from jax import lax
from jax.experimental import pallas as pl
from jax.experimental.pallas import tpu as pltpu

EPS = 1e-8

# dot_general dims for y = x @ W.T with W stored (out_dim, in_dim) like nn.Linear.
_LINEAR_DN = (((1,), (1,)), ((), ()))


# --------------------------------------------------------------------------- #
# VMEM / generation planning
# --------------------------------------------------------------------------- #
def _vmem_plan():
    """Return (vmem_budget_bytes, tensorcores_per_chip)."""
    vmem_phys = 64 << 20          # conservative default = v7x per-TC VMEM
    cores = 1
    try:
        info = pltpu.get_tpu_info()
        vmem_phys = int(info.vmem_capacity_bytes)
        cores = max(cores, int(getattr(info, "num_cores", 1) or 1))
    except Exception:
        pass
    try:
        dev = jax.devices()[0]
        kind = str(getattr(dev, "device_kind", "")).lower()
        if "v7" in kind:          # v7x: 2 TensorCores per chip
            cores = max(cores, 2)
        cores = max(cores, int(getattr(dev, "num_cores", 1) or 1))
    except Exception:
        pass
    budget = (vmem_phys * 3) // 4   # ~96 MiB on v5e/v6e (128), ~48 MiB on v7x (64)
    return budget, cores


def _fused_block_bytes(bn, D, T, itemsize):
    """Padded VMEM footprint of one fused-kernel block (in+out double-buffered,
    plus in-kernel f32 working copies, plus weights and compiler headroom)."""
    sub = max(8, 32 // itemsize)                  # 8 sublanes for f32, 16 for bf16
    d_pad = pl.cdiv(D, sub) * sub
    t_pad = pl.cdiv(T, 128) * 128
    slab = bn * d_pad * t_pad
    io = slab * itemsize * 4                      # x in + out, each double-buffered
    work = slab * 4 * 2                           # f32 temporaries (centered / output pass)
    d_lane = pl.cdiv(D, 128) * 128
    weights = 3 * d_pad * d_lane * 4 + d_lane * 4
    return io + work + weights + (2 << 20)        # + internal compiler scratch headroom


def _pick_block_batch(N, D, T, itemsize, budget, cores):
    """Largest divisor of N whose padded block fits the budget.  On dual-TC
    chips keep an even number of grid steps so both cores get equal work; on
    single-TC chips a single grid step is preferred (less per-step overhead).
    Returns None if even bn=1 does not fit (caller falls back to the split path)."""
    fits = [bn for bn in range(1, N + 1)
            if N % bn == 0 and _fused_block_bytes(bn, D, T, itemsize) <= budget]
    if not fits:
        return None
    if cores >= 2 and N >= 2:
        even = [bn for bn in fits if (N // bn) >= 2 and (N // bn) % 2 == 0]
        if even:
            return max(even)
    return max(fits)


def _pick_seq_tile(D, T, itemsize, budget):
    """Sequence tile for the split path: lane-dense (multiple of 128) divisor
    of T that fits the budget; falls back to T itself if T % 128 != 0."""
    sub = max(8, 32 // itemsize)
    d_pad = pl.cdiv(D, sub) * sub

    def bytes_for(tt):
        t_pad = pl.cdiv(tt, 128) * 128
        return d_pad * t_pad * (itemsize * 4 + 8) + (2 << 20)

    cands = [t for t in range(128, T + 1, 128) if T % t == 0]
    if not cands:
        cands = [T]
    fits = [t for t in cands if bytes_for(t) <= budget]
    return max(fits) if fits else min(cands)


# --------------------------------------------------------------------------- #
# Fused single-sweep kernel: whole (bn, D, T) slab is VMEM-resident.
# --------------------------------------------------------------------------- #
def _dain_fused_kernel(x_ref, wm_ref, ws_ref, wg_ref, bg_ref, o_ref):
    inv_t = jnp.float32(1.0 / x_ref.shape[-1])

    # VMEM read #1: per-feature mean over the sequence (lane axis, XLU reduce).
    avg = jnp.sum(x_ref[...].astype(jnp.float32), axis=-1) * inv_t          # (bn, D)
    a_avg = lax.dot_general(avg, wm_ref[...], _LINEAR_DN,
                            preferred_element_type=jnp.float32)             # (bn, D)

    # VMEM read #2: centered second moment — exactly the PyTorch two-pass
    # E[(x - a_avg)^2] (no raw-moment cancellation).  Only O(bn*D) stats stay
    # live across the dependent matmuls; the block itself is re-read per phase.
    xc = x_ref[...].astype(jnp.float32) - a_avg[..., None]                  # (bn, D, T)
    std = jnp.sqrt(jnp.sum(xc * xc, axis=-1) * inv_t + EPS)                 # (bn, D)
    a_std = lax.dot_general(std, ws_ref[...], _LINEAR_DN,
                            preferred_element_type=jnp.float32)
    a_std = jnp.where(a_std <= EPS, jnp.float32(1.0), a_std)
    inv_std = 1.0 / a_std                                                    # folded into k

    # Gating: mean of the normalized signal is (avg - a_avg) / a_std exactly.
    avg2 = (avg - a_avg) * inv_std
    gate = jax.nn.sigmoid(
        lax.dot_general(avg2, wg_ref[...], _LINEAR_DN,
                        preferred_element_type=jnp.float32) + bg_ref[...])

    # VMEM read #3 + store: out = ((x - a_avg)/a_std) * gate = x*k + b.
    k = gate * inv_std
    b = -a_avg * k
    o_ref[...] = (x_ref[...].astype(jnp.float32) * k[..., None]
                  + b[..., None]).astype(o_ref.dtype)


# --------------------------------------------------------------------------- #
# Split (T-tiled) fallback kernels for slabs that do not fit VMEM.
# --------------------------------------------------------------------------- #
def _mean_kernel(x_ref, avg_ref, s_ref, *, inv_t):
    t = pl.program_id(1)

    @pl.when(t == 0)
    def _():
        s_ref[...] = jnp.zeros_like(s_ref)

    s_ref[...] += jnp.sum(x_ref[...].astype(jnp.float32), axis=-1, keepdims=True)

    @pl.when(t == pl.num_programs(1) - 1)
    def _():
        avg_ref[...] = s_ref[...] * inv_t


def _var_kernel(x_ref, aavg_ref, var_ref, s_ref, *, inv_t):
    t = pl.program_id(1)

    @pl.when(t == 0)
    def _():
        s_ref[...] = jnp.zeros_like(s_ref)

    xc = x_ref[...].astype(jnp.float32) - aavg_ref[...]          # (1,D,tT) - (1,D,1)
    s_ref[...] += jnp.sum(xc * xc, axis=-1, keepdims=True)

    @pl.when(t == pl.num_programs(1) - 1)
    def _():
        var_ref[...] = s_ref[...] * inv_t


def _apply_kernel(x_ref, k_ref, b_ref, o_ref):
    o_ref[...] = (x_ref[...].astype(jnp.float32) * k_ref[...]
                  + b_ref[...]).astype(o_ref.dtype)


def _dain_full_split(x, w_mean, w_scale, w_gate, b_gate, *, budget, seq_tile=None):
    N, D, T = x.shape
    itemsize = jnp.dtype(x.dtype).itemsize
    tt = seq_tile if seq_tile is not None else _pick_seq_tile(D, T, itemsize, budget)
    assert T % tt == 0, "sequence tile must divide seq_len"
    nt = T // tt
    inv_t = 1.0 / T

    x_spec = pl.BlockSpec((1, D, tt), lambda i, t: (i, 0, t))
    stat_spec = pl.BlockSpec((1, D, 1), lambda i, t: (i, 0, 0))
    stat_shape = jax.ShapeDtypeStruct((N, D, 1), jnp.float32)
    scratch = [pltpu.VMEM((1, D, 1), jnp.float32)]
    cp_red = pltpu.CompilerParams(dimension_semantics=("parallel", "arbitrary"),
                                  vmem_limit_bytes=budget)

    # Pass 1 over HBM: per-feature mean.
    avg3 = pl.pallas_call(
        partial(_mean_kernel, inv_t=inv_t),
        out_shape=stat_shape,
        grid_spec=pltpu.PrefetchScalarGridSpec(
            num_scalar_prefetch=0, grid=(N, nt),
            in_specs=[x_spec], out_specs=stat_spec, scratch_shapes=scratch),
        compiler_params=cp_red,
    )(x)
    avg = avg3[..., 0]                                            # (N, D) f32

    a_avg = avg @ w_mean.T                                        # tiny (N,D)@(D,D)

    # Pass 2 over HBM: centered second moment (matches PyTorch two-pass).
    var3 = pl.pallas_call(
        partial(_var_kernel, inv_t=inv_t),
        out_shape=stat_shape,
        grid_spec=pltpu.PrefetchScalarGridSpec(
            num_scalar_prefetch=0, grid=(N, nt),
            in_specs=[x_spec, stat_spec], out_specs=stat_spec, scratch_shapes=scratch),
        compiler_params=cp_red,
    )(x, a_avg[..., None])
    std = jnp.sqrt(var3[..., 0] + EPS)

    a_std = std @ w_scale.T
    a_std = jnp.where(a_std <= EPS, jnp.float32(1.0), a_std)
    inv_std = 1.0 / a_std
    avg2 = (avg - a_avg) * inv_std
    gate = jax.nn.sigmoid(avg2 @ w_gate.T + b_gate)
    k = (gate * inv_std).astype(jnp.float32)
    b = (-a_avg * k).astype(jnp.float32)

    # Pass 3 over HBM: out = x*k + b.
    return pl.pallas_call(
        _apply_kernel,
        out_shape=jax.ShapeDtypeStruct((N, D, T), x.dtype),
        grid_spec=pltpu.PrefetchScalarGridSpec(
            num_scalar_prefetch=0, grid=(N, nt),
            in_specs=[x_spec,
                      pl.BlockSpec((1, D, 1), lambda i, t: (i, 0, 0)),
                      pl.BlockSpec((1, D, 1), lambda i, t: (i, 0, 0))],
            out_specs=x_spec),
        compiler_params=pltpu.CompilerParams(
            dimension_semantics=("parallel", "parallel"),
            vmem_limit_bytes=budget),
    )(x, k[..., None], b[..., None])


# --------------------------------------------------------------------------- #
# Public wrapper
# --------------------------------------------------------------------------- #
def dain_layer_full(x, w_mean, w_scale, w_gate, b_gate, *,
                    block_batch=None, force_split=False, seq_tile=None):
    """x: (N, D, T) in the native PyTorch layout.  Weights: (D, D) nn.Linear
    (out, in) layout; bias: (D,).  Returns (N, D, T)."""
    N, D, T = x.shape
    itemsize = jnp.dtype(x.dtype).itemsize
    budget, cores = _vmem_plan()

    bn = block_batch
    if bn is None and not force_split:
        bn = _pick_block_batch(N, D, T, itemsize, budget, cores)
    if force_split or bn is None:
        # Per-batch (D, T) slab doesn't fit VMEM (or split explicitly requested):
        # T-tiled 3-pass path.
        return _dain_full_split(x, w_mean, w_scale, w_gate, b_gate,
                                budget=budget, seq_tile=seq_tile)

    assert N % bn == 0, "block_batch must divide the batch dimension"
    bg = b_gate.reshape(1, D)

    return pl.pallas_call(
        _dain_fused_kernel,
        out_shape=jax.ShapeDtypeStruct((N, D, T), x.dtype),
        grid_spec=pltpu.PrefetchScalarGridSpec(
            num_scalar_prefetch=0,
            grid=(N // bn,),
            in_specs=[
                pl.BlockSpec((bn, D, T), lambda i: (i, 0, 0)),   # x (native layout)
                pl.BlockSpec((D, D), lambda i: (0, 0)),          # W_mean
                pl.BlockSpec((D, D), lambda i: (0, 0)),          # W_scale
                pl.BlockSpec((D, D), lambda i: (0, 0)),          # W_gate
                pl.BlockSpec((1, D), lambda i: (0, 0)),          # b_gate
            ],
            out_specs=pl.BlockSpec((bn, D, T), lambda i: (i, 0, 0)),
        ),
        compiler_params=pltpu.CompilerParams(
            dimension_semantics=("parallel",),
            vmem_limit_bytes=budget),
    )(x, w_mean, w_scale, w_gate, bg)


def dain_layer_full_ref(x, w_mean, w_scale, w_gate, b_gate):
    """Pure-JAX reference mirroring the PyTorch forward (mode='full')."""
    avg = jnp.mean(x, axis=2)
    a_avg = avg @ w_mean.T
    x = x - a_avg[:, :, None]
    std = jnp.sqrt(jnp.mean(x ** 2, axis=2) + EPS)
    a_std = std @ w_scale.T
    a_std = jnp.where(a_std <= EPS, 1.0, a_std)
    x = x / a_std[:, :, None]
    avg2 = jnp.mean(x, axis=2)
    gate = jax.nn.sigmoid(avg2 @ w_gate.T + b_gate)
    return x * gate[:, :, None]


if __name__ == "__main__":
    # Small shapes consistent with DAIN: batch=2, input_dim=32, seq_len=16.
    N, D, T = 2, 32, 16
    key = jax.random.PRNGKey(0)
    kx, kw, kb, kx2 = jax.random.split(key, 4)

    x = jax.random.normal(kx, (N, D, T), dtype=jnp.float32)

    # Parameter init mirroring the module's __init__:
    #   mean_layer / scaling_layer: identity weights, no bias.
    #   gating_layer: default nn.Linear init U(-1/sqrt(D), 1/sqrt(D)) with bias.
    w_mean = jnp.eye(D, dtype=jnp.float32)
    w_scale = jnp.eye(D, dtype=jnp.float32)
    bound = 1.0 / (D ** 0.5)
    w_gate = jax.random.uniform(kw, (D, D), jnp.float32, -bound, bound)
    b_gate = jax.random.uniform(kb, (D,), jnp.float32, -bound, bound)

    # Fused single-sweep path.
    out = jax.block_until_ready(dain_layer_full(x, w_mean, w_scale, w_gate, b_gate))
    ref = dain_layer_full_ref(x, w_mean, w_scale, w_gate, b_gate)
    assert out.shape == (N, D, T)
    assert jnp.max(jnp.abs(out - ref)) < 1e-4, "fused path mismatch vs reference"

    # T-tiled split fallback path (forced, lane-dense 128-wide tiles) so it is
    # also validated on-device.
    T2 = 256
    x2 = jax.random.normal(kx2, (N, D, T2), dtype=jnp.float32)
    out2 = jax.block_until_ready(
        dain_layer_full(x2, w_mean, w_scale, w_gate, b_gate,
                        force_split=True, seq_tile=128))
    ref2 = dain_layer_full_ref(x2, w_mean, w_scale, w_gate, b_gate)
    assert out2.shape == (N, D, T2)
    assert jnp.max(jnp.abs(out2 - ref2)) < 1e-4, "split path mismatch vs reference"

    print("KERNEL_OK")
</pallas_src>

<mosaic_0001>
module attributes {stable_mosaic.version = 11 : i64} {
  func.func @_dain_fused_kernel(%arg0: i32, %arg1: memref<2x32x16xf32, #tpu.memory_space<vmem>>, %arg2: memref<32x32xf32, #tpu.memory_space<vmem>>, %arg3: memref<32x32xf32, #tpu.memory_space<vmem>>, %arg4: memref<32x32xf32, #tpu.memory_space<vmem>>, %arg5: memref<1x32xf32, #tpu.memory_space<vmem>>, %arg6: memref<2x32x16xf32, #tpu.memory_space<vmem>>) attributes {dimension_semantics = [#tpu.dimension_semantics<parallel>], iteration_bounds = array<i64: 1>, scalar_prefetch = 0 : i64, scratch_operands = 0 : i64, tpu.core_type = #tpu.core_type<tc>, window_params = [{transform_indices = @transform_0, window_bounds = array<i64: 2, 32, 16>}, {pipeline_mode = #tpu.pipeline_mode<synchronous>, transform_indices = @transform_1, window_bounds = array<i64: 32, 32>}, {pipeline_mode = #tpu.pipeline_mode<synchronous>, transform_indices = @transform_2, window_bounds = array<i64: 32, 32>}, {pipeline_mode = #tpu.pipeline_mode<synchronous>, transform_indices = @transform_3, window_bounds = array<i64: 32, 32>}, {pipeline_mode = #tpu.pipeline_mode<synchronous>, transform_indices = @transform_4, window_bounds = array<i64: 1, 32>}, {transform_indices = @transform_5, window_bounds = array<i64: 2, 32, 16>}]} {
    %c0 = arith.constant 0 : index
    %c0_0 = arith.constant 0 : index
    %c0_1 = arith.constant 0 : index
    %0 = vector.load %arg1[%c0, %c0_0, %c0_1] : memref<2x32x16xf32, #tpu.memory_space<vmem>>, vector<2x32x16xf32>
    %cst = arith.constant dense<0.000000e+00> : vector<2x32xf32>
    %1 = vector.multi_reduction <add>, %0, %cst [2] : vector<2x32x16xf32> to vector<2x32xf32>
    %cst_2 = arith.constant 6.250000e-02 : f32
    %2 = vector.broadcast %cst_2 : f32 to vector<2x32xf32>
    %3 = arith.mulf %1, %2 : vector<2x32xf32>
    %c0_3 = arith.constant 0 : index
    %c0_4 = arith.constant 0 : index
    %4 = vector.load %arg2[%c0_3, %c0_4] : memref<32x32xf32, #tpu.memory_space<vmem>>, vector<32x32xf32>
    %cst_5 = arith.constant dense<0.000000e+00> : vector<2x32xf32>
    %5 = tpu.matmul %3, %4, %cst_5 {dimension_numbers = #tpu.dot_dimension_numbers<[1], [1], [0], [0], [0, 0, 1, 0], [], []>} : vector<2x32xf32>, vector<32x32xf32>, vector<2x32xf32> -> vector<2x32xf32>
    %c0_6 = arith.constant 0 : index
    %c0_7 = arith.constant 0 : index
    %c0_8 = arith.constant 0 : index
    %6 = vector.load %arg1[%c0_6, %c0_7, %c0_8] : memref<2x32x16xf32, #tpu.memory_space<vmem>>, vector<2x32x16xf32>
    %7 = vector.shape_cast %5 : vector<2x32xf32> to vector<2x32x1xf32>
    %8 = vector.broadcast %7 : vector<2x32x1xf32> to vector<2x32x16xf32>
    %9 = arith.subf %6, %8 : vector<2x32x16xf32>
    %10 = arith.mulf %9, %9 : vector<2x32x16xf32>
    %cst_9 = arith.constant dense<0.000000e+00> : vector<2x32xf32>
    %11 = vector.multi_reduction <add>, %10, %cst_9 [2] : vector<2x32x16xf32> to vector<2x32xf32>
    %cst_10 = arith.constant 6.250000e-02 : f32
    %12 = vector.broadcast %cst_10 : f32 to vector<2x32xf32>
    %13 = arith.mulf %11, %12 : vector<2x32xf32>
    %cst_11 = arith.constant 9.99999993E-9 : f32
    %14 = vector.broadcast %cst_11 : f32 to vector<2x32xf32>
    %15 = arith.addf %13, %14 : vector<2x32xf32>
    %16 = math.sqrt %15 : vector<2x32xf32>
    %c0_12 = arith.constant 0 : index
    %c0_13 = arith.constant 0 : index
    %17 = vector.load %arg3[%c0_12, %c0_13] : memref<32x32xf32, #tpu.memory_space<vmem>>, vector<32x32xf32>
    %cst_14 = arith.constant dense<0.000000e+00> : vector<2x32xf32>
    %18 = tpu.matmul %16, %17, %cst_14 {dimension_numbers = #tpu.dot_dimension_numbers<[1], [1], [0], [0], [0, 0, 1, 0], [], []>} : vector<2x32xf32>, vector<32x32xf32>, vector<2x32xf32> -> vector<2x32xf32>
    %cst_15 = arith.constant 9.99999993E-9 : f32
    %19 = vector.broadcast %cst_15 : f32 to vector<2x32xf32>
    %20 = arith.cmpf ole, %18, %19 : vector<2x32xf32>
    %cst_16 = arith.constant 1.000000e+00 : f32
    %21 = vector.broadcast %cst_16 : f32 to vector<2x32xf32>
    %22 = arith.select %20, %21, %18 : vector<2x32xi1>, vector<2x32xf32>
    %cst_17 = arith.constant 1.000000e+00 : f32
    %23 = vector.broadcast %cst_17 : f32 to vector<2x32xf32>
    %24 = arith.divf %23, %22 : vector<2x32xf32>
    %25 = arith.subf %3, %5 : vector<2x32xf32>
    %26 = arith.mulf %25, %24 : vector<2x32xf32>
    %c0_18 = arith.constant 0 : index
    %c0_19 = arith.constant 0 : index
    %27 = vector.load %arg4[%c0_18, %c0_19] : memref<32x32xf32, #tpu.memory_space<vmem>>, vector<32x32xf32>
    %cst_20 = arith.constant dense<0.000000e+00> : vector<2x32xf32>
    %28 = tpu.matmul %26, %27, %cst_20 {dimension_numbers = #tpu.dot_dimension_numbers<[1], [1], [0], [0], [0, 0, 1, 0], [], []>} : vector<2x32xf32>, vector<32x32xf32>, vector<2x32xf32> -> vector<2x32xf32>
    %c0_21 = arith.constant 0 : index
    %c0_22 = arith.constant 0 : index
    %29 = vector.load %arg5[%c0_21, %c0_22] : memref<1x32xf32, #tpu.memory_space<vmem>>, vector<1x32xf32>
    %30 = vector.broadcast %29 : vector<1x32xf32> to vector<2x32xf32>
    %31 = arith.addf %28, %30 : vector<2x32xf32>
    %32 = arith.negf %31 : vector<2x32xf32>
    %33 = math.exp %32 : vector<2x32xf32>
    %cst_23 = arith.constant 1.000000e+00 : f32
    %34 = vector.broadcast %cst_23 : f32 to vector<2x32xf32>
    %35 = arith.addf %34, %33 : vector<2x32xf32>
    %36 = arith.divf %34, %35 : vector<2x32xf32>
    %37 = arith.mulf %36, %24 : vector<2x32xf32>
    %cst_24 = arith.constant 0.000000e+00 : f32
    %38 = vector.broadcast %cst_24 : f32 to vector<2x32xf32>
    %39 = arith.subf %38, %5 : vector<2x32xf32>
    %40 = arith.mulf %39, %37 : vector<2x32xf32>
    %c0_25 = arith.constant 0 : index
    %c0_26 = arith.constant 0 : index
    %c0_27 = arith.constant 0 : index
    %41 = vector.load %arg1[%c0_25, %c0_26, %c0_27] : memref<2x32x16xf32, #tpu.memory_space<vmem>>, vector<2x32x16xf32>
    %42 = vector.shape_cast %37 : vector<2x32xf32> to vector<2x32x1xf32>
    %43 = vector.broadcast %42 : vector<2x32x1xf32> to vector<2x32x16xf32>
    %44 = arith.mulf %41, %43 : vector<2x32x16xf32>
    %45 = vector.shape_cast %40 : vector<2x32xf32> to vector<2x32x1xf32>
    %46 = vector.broadcast %45 : vector<2x32x1xf32> to vector<2x32x16xf32>
    %47 = arith.addf %44, %46 : vector<2x32x16xf32>
    %c0_28 = arith.constant 0 : index
    %c0_29 = arith.constant 0 : index
    %c0_30 = arith.constant 0 : index
    %48 = vector.load %arg6[%c0_28, %c0_29, %c0_30] : memref<2x32x16xf32, #tpu.memory_space<vmem>>, vector<2x32x16xf32>
    tpu.vector_store %arg6[%c0_28, %c0_29, %c0_30], %47 {strides = array<i32>} : memref<2x32x16xf32, #tpu.memory_space<vmem>>, vector<2x32x16xf32>,
    return
  }
  func.func @transform_0(%arg0: i32) -> (i32, i32, i32) {
    %c0_i32 = arith.constant 0 : i32
    %c0_i32_0 = arith.constant 0 : i32
    %c0_i32_1 = arith.constant 0 : i32
    return %arg0, %c0_i32, %c0_i32_0 : i32, i32, i32
  }
  func.func @transform_1(%arg0: i32) -> (i32, i32) {
    %c0_i32 = arith.constant 0 : i32
    %c0_i32_0 = arith.constant 0 : i32
    %c0_i32_1 = arith.constant 0 : i32
    return %c0_i32, %c0_i32_0 : i32, i32
  }
  func.func @transform_2(%arg0: i32) -> (i32, i32) {
    %c0_i32 = arith.constant 0 : i32
    %c0_i32_0 = arith.constant 0 : i32
    %c0_i32_1 = arith.constant 0 : i32
    return %c0_i32, %c0_i32_0 : i32, i32
  }
  func.func @transform_3(%arg0: i32) -> (i32, i32) {
    %c0_i32 = arith.constant 0 : i32
    %c0_i32_0 = arith.constant 0 : i32
    %c0_i32_1 = arith.constant 0 : i32
    return %c0_i32, %c0_i32_0 : i32, i32
  }
  func.func @transform_4(%arg0: i32) -> (i32, i32) {
    %c0_i32 = arith.constant 0 : i32
    %c0_i32_0 = arith.constant 0 : i32
    %c0_i32_1 = arith.constant 0 : i32
    return %c0_i32, %c0_i32_0 : i32, i32
  }
  func.func @transform_5(%arg0: i32) -> (i32, i32, i32) {
    %c0_i32 = arith.constant 0 : i32
    %c0_i32_0 = arith.constant 0 : i32
    %c0_i32_1 = arith.constant 0 : i32
    return %arg0, %c0_i32, %c0_i32_0 : i32, i32, i32
  }
}

</mosaic_0001>

<llo_original>
// kernel: tpu_custom_call.1
$region0: #{tpu_custom_call.1}
  #allocation0 [shape = 'u32[]', space=smem, size = 0x4, offset = 0x4, fixed_abs, tag = 'smem constant byte address 0x4 - core index']
  #allocation1 [shape = 'u32[144,128]{1,0:T(1,128)}', space=vmem, size = 0x12000, scoped, tag = 'internal scratch']
  %s0 = inlined_call_operand.vmem [shape: f32[2,32,16], index: 0, kind: input, shape index: {}]
  %s1 = inlined_call_operand.vmem [shape: f32[32,32], index: 1, kind: input, shape index: {}]
  %s2 = inlined_call_operand.vmem [shape: f32[32,32], index: 2, kind: input, shape index: {}]
  %s3 = inlined_call_operand.vmem [shape: f32[32,32], index: 3, kind: input, shape index: {}]
  %s4 = inlined_call_operand.vmem [shape: f32[1,32], index: 4, kind: input, shape index: {}]
  %s5 = inlined_call_operand.vmem [shape: f32[2,32,16], index: 5, kind: output, shape index: {}]
  %s6 = sld [smem:[#allocation0]]
  $region30: #{tpu_custom_call.1} parent=0
    _
  %s8 = ssub.s32 1, %s6
  %s9 = scalar_select 0, %s8, %s6
  // Predicated region
  $region2: #{tpu_custom_call.1} parent=0 // pred_check
    _
  $region3: #{tpu_custom_call.1} parent=0 // pred_check_branch
    %11 = sbr.rel (0) target = $region5
  $region4: #{tpu_custom_call.1} parent=0 // pred_region
    _
  $region5: #{tpu_custom_call.1} parent=0 // pred_fallthru
    _
  // Predicated region
  $region6: #{tpu_custom_call.1} parent=0 // pred_check
    _
  $region7: #{tpu_custom_call.1} parent=0 // pred_check_branch
    %13 = sbr.rel (0) target = $region9
  $region8: #{tpu_custom_call.1} parent=0 // pred_region
    _
  $region9: #{tpu_custom_call.1} parent=0 // pred_fallthru
    _
  // Predicated region
  $region10: #{tpu_custom_call.1} parent=0 // pred_check
    _
  $region11: #{tpu_custom_call.1} parent=0 // pred_check_branch
    %15 = sbr.rel (0) target = $region13
  $region12: #{tpu_custom_call.1} parent=0 // pred_region
    _
  $region13: #{tpu_custom_call.1} parent=0 // pred_fallthru
    _
  // Predicated region
  $region14: #{tpu_custom_call.1} parent=0 // pred_check
    _
  $region15: #{tpu_custom_call.1} parent=0 // pred_check_branch
    %17 = sbr.rel (0) target = $region17
  $region16: #{tpu_custom_call.1} parent=0 // pred_region
    _
  $region17: #{tpu_custom_call.1} parent=0 // pred_fallthru
    _
  // Predicated region
  $region18: #{tpu_custom_call.1} parent=0 // pred_check
    _
  $region19: #{tpu_custom_call.1} parent=0 // pred_check_branch
    %19 = sbr.rel (0) target = $region21
  $region20: #{tpu_custom_call.1} parent=0 // pred_region
    _
  $region21: #{tpu_custom_call.1} parent=0 // pred_fallthru
    _
  %v20 = vld [vmem:[%s0] sm:$0xff]
  %v21 = vld [vmem:[%s0 + $0x8] sm:$0xff]
  %v22 = vld [vmem:[%s0 + $0x10] sm:$0xff]
  %v23 = vld [vmem:[%s0 + $0x18] sm:$0xff]
  %v24 = vld [vmem:[%s0 + $0x20] sm:$0xff]
  %v25 = vld [vmem:[%s0 + $0x28] sm:$0xff]
  %v26 = vld [vmem:[%s0 + $0x30] sm:$0xff]
  %v27 = vld [vmem:[%s0 + $0x38] sm:$0xff]
  %vm28 = vcmask 130048
  %v29 = vsel %vm28, %v20, 0.0
  %30 = vadd.xlane.f32.xlu0 %v29
  %v31 = vpop.xlane.xlu0 %30
  %v32 = vsel %vm28, %v21, 0.0
  %33 = vadd.xlane.f32.xlu0 %v32
  %v34 = vpop.xlane.xlu0 %33
  %v35 = vsel %vm28, %v22, 0.0
  %36 = vadd.xlane.f32.xlu0 %v35
  %v37 = vpop.xlane.xlu0 %36
  %v38 = vsel %vm28, %v23, 0.0
  %39 = vadd.xlane.f32.xlu0 %v38
  %v40 = vpop.xlane.xlu0 %39
  %v41 = vsel %vm28, %v24, 0.0
  %42 = vadd.xlane.f32.xlu0 %v41
  %v43 = vpop.xlane.xlu0 %42
  %v44 = vsel %vm28, %v25, 0.0
  %45 = vadd.xlane.f32.xlu0 %v44
  %v46 = vpop.xlane.xlu0 %45
  %v47 = vsel %vm28, %v26, 0.0
  %48 = vadd.xlane.f32.xlu0 %v47
  %v49 = vpop.xlane.xlu0 %48
  %v50 = vsel %vm28, %v27, 0.0
  %51 = vadd.xlane.f32.xlu0 %v50
  %v52 = vpop.xlane.xlu0 %51
  %v53 = vmul.f32 %v31, 0.0625
  %v54 = vmul.f32 %v34, 0.0625
  %v55 = vmul.f32 %v37, 0.0625
  %v56 = vmul.f32 %v40, 0.0625
  %v57 = vmul.f32 %v43, 0.0625
  %v58 = vmul.f32 %v46, 0.0625
  %v59 = vmul.f32 %v49, 0.0625
  %v60 = vmul.f32 %v52, 0.0625
  %v61 = vld [vmem:[%s1] sm:$0xff]
  %v62 = vld [vmem:[%s1 + $0x8] sm:$0xff]
  %v63 = vld [vmem:[%s1 + $0x10] sm:$0xff]
  %v64 = vld [vmem:[%s1 + $0x18] sm:$0xff]
  %v73 = vlaneseq
  %v74 = vand.u32 %v73, 127
  %v75 = vlaneseq
  %v76 = vshrl.u32 %v75, 7
  %v77 = vsub.s32 %v74, %v76
  %v78 = vrot.slane %v53, %v77
  %v79 = vadd.s32 %v74, 4294967288
  %v80 = vlaneseq
  %v81 = vshrl.u32 %v80, 7
  %v82 = vsub.s32 %v79, %v81
  %v83 = vrot.slane %v54, %v82
  %vm84 = vcmask 130112
  %v85 = vsel %vm84, %v83, %v78
  %v86 = vadd.s32 %v74, 4294967280
  %v87 = vlaneseq
  %v88 = vshrl.u32 %v87, 7
  %v89 = vsub.s32 %v86, %v88
  %v90 = vrot.slane %v55, %v89
  %vm91 = vcmask 195712
  %v92 = vsel %vm91, %v90, %v85
  %v93 = vadd.s32 %v74, 4294967272
  %v94 = vlaneseq
  %v95 = vshrl.u32 %v94, 7
  %v96 = vsub.s32 %v93, %v95
  %v97 = vrot.slane %v56, %v96
  %vm98 = vcmask 261312
  %v99 = vsel %vm98, %v97, %v92
  %v100 = vlaneseq
  %v101 = vshrl.u32 %v100, 7
  %v102 = vsub.s32 %v74, %v101
  %v103 = vrot.slane %v57, %v102
  %v104 = vlaneseq
  %v105 = vshrl.u32 %v104, 7
  %v106 = vsub.s32 %v79, %v105
  %v107 = vrot.slane %v58, %v106
  %v108 = vsel %vm84, %v107, %v103
  %v109 = vlaneseq
  %v110 = vshrl.u32 %v109, 7
  %v111 = vsub.s32 %v86, %v110
  %v112 = vrot.slane %v59, %v111
  %v113 = vsel %vm91, %v112, %v108
  %v114 = vlaneseq
  %v115 = vshrl.u32 %v114, 7
  %v116 = vsub.s32 %v93, %v115
  %v117 = vrot.slane %v60, %v116
  %v118 = vsel %vm98, %v117, %v113
  %vm119 = vcmask 1041409
  %v120 = vsel %vm119, %v118, %v99
  %vm121 = vcmask 261120
  %v122 = vsel %vm121, %v120, 0
  %v125 = vsel %vm121, %v61, 0
  %v128 = vsel %vm121, %v62, 0
  %v131 = vsel %vm121, %v63, 0
  %v134 = vsel %vm121, %v64, 0
  %136 = vmatprep.subr.mxu0 0.0
  %137 = vmatpush1.xpose.msra.mxu0 %v125
  %138 = vmatprep.subr.mxu0 0.0
  %139 = vmatpush1.xpose.msra.mxu0 %v128
  %140 = vmatprep.subr.mxu0 0.0
  %141 = vmatpush1.xpose.msra.mxu0 %v131
  %142 = vmatprep.subr.mxu0 0.0
  %143 = vmatpush1.xpose.msra.mxu0 %v134
  %144 = vmatprep.subr.mxu0 0.0
  %145 = vmatpush1.xpose.msra.mxu0 0.0
  %146 = vmatprep.subr.mxu0 0.0
  %147 = vmatpush1.xpose.msra.mxu0 0.0
  %148 = vmatprep.subr.mxu0 0.0
  %149 = vmatpush1.xpose.msra.mxu0 0.0
  %150 = vmatprep.subr.mxu0 0.0
  %151 = vmatpush1.xpose.msra.mxu0 0.0
  %152 = vmatprep.subr.mxu0 0.0
  %153 = vmatpush1.xpose.msra.mxu0 0.0
  %154 = vmatprep.subr.mxu0 0.0
  %155 = vmatpush1.xpose.msra.mxu0 0.0
  %156 = vmatprep.subr.mxu0 0.0
  %157 = vmatpush1.xpose.msra.mxu0 0.0
  %158 = vmatprep.subr.mxu0 0.0
  %159 = vmatpush1.xpose.msra.mxu0 0.0
  %160 = vmatprep.subr.mxu0 0.0
  %161 = vmatpush1.xpose.msra.mxu0 0.0
  %162 = vmatprep.subr.mxu0 0.0
  %163 = vmatpush1.xpose.msra.mxu0 0.0
  %164 = vmatprep.subr.mxu0 0.0
  %165 = vmatpush1.xpose.msra.mxu0 0.0
  %166 = vmatprep.subr.mxu0 0.0
  %167 = vmatpush1.xpose.msra.mxu0 0.0
  %168 = vmatprep.subr.mxu0 0.0
  %169 = vmatpush1.xpose.msra.mxu0 0.0
  %170 = vmatprep.subr.mxu0 0.0
  %171 = vmatpush1.xpose.msra.mxu0 0.0
  %172 = vmatprep.subr.mxu0 0.0
  %173 = vmatpush1.xpose.msra.mxu0 0.0
  %174 = vmatprep.subr.mxu0 0.0
  %175 = vmatpush1.xpose.msra.mxu0 0.0
  %176 = vmatprep.subr.mxu0 0.0
  %177 = vmatpush1.xpose.msra.mxu0 0.0
  %178 = vmatprep.subr.mxu0 0.0
  %179 = vmatpush1.xpose.msra.mxu0 0.0
  %180 = vmatprep.subr.mxu0 0.0
  %181 = vmatpush1.xpose.msra.mxu0 0.0
  %182 = vmatprep.subr.mxu0 0.0
  %183 = vmatpush1.xpose.msra.mxu0 0.0
  %184 = vmatprep.subr.mxu0 0.0
  %185 = vmatpush1.xpose.msra.mxu0 0.0
  %186 = vmatprep.subr.mxu0 0.0
  %187 = vmatpush1.xpose.msra.mxu0 0.0
  %188 = vmatprep.subr.mxu0 0.0
  %189 = vmatpush1.xpose.msra.mxu0 0.0
  %190 = vmatprep.subr.mxu0 0.0
  %191 = vmatpush1.xpose.msra.mxu0 0.0
  %192 = vmatprep.subr.mxu0 0.0
  %193 = vmatpush1.xpose.msra.mxu0 0.0
  %194 = vmatprep.subr.mxu0 0.0
  %195 = vmatpush1.xpose.msra.mxu0 0.0
  %196 = vmatprep.subr.mxu0 0.0
  %197 = vmatpush1.xpose.msra.mxu0 0.0
  %198 = vmatprep.subr.mxu0 0.0
  %199 = vmatpush1.xpose.msra.mxu0 0.0
  %200 = vmatprep.mubr.f32.mxu0 0.0
  %201 = vmatmul.mubr.f32.gmra.mrb[0].mxu0 %v122
  %v202 = vpop.f32.mrb[0].mxu0
  %v203 = vadd.f32 0.0, %v202
  %v204 = vpop.f32.mrb[0].mxu0
  %205 = vdwg.mxu0
  %v206 = vlaneseq
  %v207 = vshrl.u32 %v206, 7
  %v208 = vsub.s32 0, %v207
  %v209 = vrot.slane %v203, %v208
  %211 = vbcast.lane.b32.xlu0 %v209, 256
  %v212 = vpop.permute.xlu0 %211
  %s214 = sor.u32 256, 8
  %215 = vbcast.lane.b32.xlu0 %v209, %s214
  %v216 = vpop.permute.xlu0 %215
  %s218 = sor.u32 256, 16
  %219 = vbcast.lane.b32.xlu0 %v209, %s218
  %v220 = vpop.permute.xlu0 %219
  %s222 = sor.u32 256, 24
  %223 = vbcast.lane.b32.xlu0 %v209, %s222
  %v224 = vpop.permute.xlu0 %223
  %v225 = vlaneseq
  %v226 = vshrl.u32 %v225, 7
  %v227 = vsub.s32 1, %v226
  %v228 = vrot.slane %v203, %v227
  %230 = vbcast.lane.b32.xlu0 %v228, 256
  %v231 = vpop.permute.xlu0 %230
  %s233 = sor.u32 256, 8
  %234 = vbcast.lane.b32.xlu0 %v228, %s233
  %v235 = vpop.permute.xlu0 %234
  %s237 = sor.u32 256, 16
  %238 = vbcast.lane.b32.xlu0 %v228, %s237
  %v239 = vpop.permute.xlu0 %238
  %s241 = sor.u32 256, 24
  %242 = vbcast.lane.b32.xlu0 %v228, %s241
  %v243 = vpop.permute.xlu0 %242
  %v244 = vsub.f32 %v20, %v212
  %v245 = vsub.f32 %v21, %v216
  %v246 = vsub.f32 %v22, %v220
  %v247 = vsub.f32 %v23, %v224
  %v248 = vsub.f32 %v24, %v231
  %v249 = vsub.f32 %v25, %v235
  %v250 = vsub.f32 %v26, %v239
  %v251 = vsub.f32 %v27, %v243
  %v252 = vmul.f32 %v244, %v244
  %v253 = vmul.f32 %v245, %v245
  %v254 = vmul.f32 %v246, %v246
  %v255 = vmul.f32 %v247, %v247
  %v256 = vmul.f32 %v248, %v248
  %v257 = vmul.f32 %v249, %v249
  %v258 = vmul.f32 %v250, %v250
  %v259 = vmul.f32 %v251, %v251
  %v260 = vsel %vm28, %v252, 0.0
  %261 = vadd.xlane.f32.xlu0 %v260
  %v262 = vpop.xlane.xlu0 %261
  %v263 = vsel %vm28, %v253, 0.0
  %264 = vadd.xlane.f32.xlu0 %v263
  %v265 = vpop.xlane.xlu0 %264
  %v266 = vsel %vm28, %v254, 0.0
  %267 = vadd.xlane.f32.xlu0 %v266
  %v268 = vpop.xlane.xlu0 %267
  %v269 = vsel %vm28, %v255, 0.0
  %270 = vadd.xlane.f32.xlu0 %v269
  %v271 = vpop.xlane.xlu0 %270
  %v272 = vsel %vm28, %v256, 0.0
  %273 = vadd.xlane.f32.xlu0 %v272
  %v274 = vpop.xlane.xlu0 %273
  %v275 = vsel %vm28, %v257, 0.0
  %276 = vadd.xlane.f32.xlu0 %v275
  %v277 = vpop.xlane.xlu0 %276
  %v278 = vsel %vm28, %v258, 0.0
  %279 = vadd.xlane.f32.xlu0 %v278
  %v280 = vpop.xlane.xlu0 %279
  %v281 = vsel %vm28, %v259, 0.0
  %282 = vadd.xlane.f32.xlu0 %v281
  %v283 = vpop.xlane.xlu0 %282
  %v284 = vmul.f32 %v262, 0.0625
  %v285 = vmul.f32 %v265, 0.0625
  %v286 = vmul.f32 %v268, 0.0625
  %v287 = vmul.f32 %v271, 0.0625
  %v288 = vmul.f32 %v274, 0.0625
  %v289 = vmul.f32 %v277, 0.0625
  %v290 = vmul.f32 %v280, 0.0625
  %v291 = vmul.f32 %v283, 0.0625
  %v292 = vadd.f32 %v284, 1e-08
  %v293 = vadd.f32 %v285, 1e-08
  %v294 = vadd.f32 %v286, 1e-08
  %v295 = vadd.f32 %v287, 1e-08
  %v296 = vadd.f32 %v288, 1e-08
  %v297 = vadd.f32 %v289, 1e-08
  %v298 = vadd.f32 %v290, 1e-08
  %v299 = vadd.f32 %v291, 1e-08
  %v300 = vrsqrt.pop %v292
  %v301 = vmul.f32 %v292, %v300
  %vm302 = vcmp.eq.f32.partialorder %v292, inf
  %v303 = vsel %vm302, %v292, %v301
  %vm304 = vcmp.eq.f32.partialorder %v292, 0.0
  %v305 = vand.u32 %v292, 2147483648
  %v306 = vsel %vm304, %v305, %v303
  %v307 = vrsqrt.pop %v293
  %v308 = vmul.f32 %v293, %v307
  %vm309 = vcmp.eq.f32.partialorder %v293, inf
  %v310 = vsel %vm309, %v293, %v308
  %vm311 = vcmp.eq.f32.partialorder %v293, 0.0
  %v312 = vand.u32 %v293, 2147483648
  %v313 = vsel %vm311, %v312, %v310
  %v314 = vrsqrt.pop %v294
  %v315 = vmul.f32 %v294, %v314
  %vm316 = vcmp.eq.f32.partialorder %v294, inf
  %v317 = vsel %vm316, %v294, %v315
  %vm318 = vcmp.eq.f32.partialorder %v294, 0.0
  %v319 = vand.u32 %v294, 2147483648
  %v320 = vsel %vm318, %v319, %v317
  %v321 = vrsqrt.pop %v295
  %v322 = vmul.f32 %v295, %v321
  %vm323 = vcmp.eq.f32.partialorder %v295, inf
  %v324 = vsel %vm323, %v295, %v322
  %vm325 = vcmp.eq.f32.partialorder %v295, 0.0
  %v326 = vand.u32 %v295, 2147483648
  %v327 = vsel %vm325, %v326, %v324
  %v328 = vrsqrt.pop %v296
  %v329 = vmul.f32 %v296, %v328
  %vm330 = vcmp.eq.f32.partialorder %v296, inf
  %v331 = vsel %vm330, %v296, %v329
  %vm332 = vcmp.eq.f32.partialorder %v296, 0.0
  %v333 = vand.u32 %v296, 2147483648
  %v334 = vsel %vm332, %v333, %v331
  %v335 = vrsqrt.pop %v297
  %v336 = vmul.f32 %v297, %v335
  %vm337 = vcmp.eq.f32.partialorder %v297, inf
  %v338 = vsel %vm337, %v297, %v336
  %vm339 = vcmp.eq.f32.partialorder %v297, 0.0
  %v340 = vand.u32 %v297, 2147483648
  %v341 = vsel %vm339, %v340, %v338
  %v342 = vrsqrt.pop %v298
  %v343 = vmul.f32 %v298, %v342
  %vm344 = vcmp.eq.f32.partialorder %v298, inf
  %v345 = vsel %vm344, %v298, %v343
  %vm346 = vcmp.eq.f32.partialorder %v298, 0.0
  %v347 = vand.u32 %v298, 2147483648
  %v348 = vsel %vm346, %v347, %v345
  %v349 = vrsqrt.pop %v299
  %v350 = vmul.f32 %v299, %v349
  %vm351 = vcmp.eq.f32.partialorder %v299, inf
  %v352 = vsel %vm351, %v299, %v350
  %vm353 = vcmp.eq.f32.partialorder %v299, 0.0
  %v354 = vand.u32 %v299, 2147483648
  %v355 = vsel %vm353, %v354, %v352
  %v356 = vld [vmem:[%s2] sm:$0xff]
  %v357 = vld [vmem:[%s2 + $0x8] sm:$0xff]
  %v358 = vld [vmem:[%s2 + $0x10] sm:$0xff]
  %v359 = vld [vmem:[%s2 + $0x18] sm:$0xff]
  %v368 = vlaneseq
  %v369 = vshrl.u32 %v368, 7
  %v370 = vsub.s32 %v74, %v369
  %v371 = vrot.slane %v306, %v370
  %v372 = vlaneseq
  %v373 = vshrl.u32 %v372, 7
  %v374 = vsub.s32 %v79, %v373
  %v375 = vrot.slane %v313, %v374
  %v376 = vsel %vm84, %v375, %v371
  %v377 = vlaneseq
  %v378 = vshrl.u32 %v377, 7
  %v379 = vsub.s32 %v86, %v378
  %v380 = vrot.slane %v320, %v379
  %v381 = vsel %vm91, %v380, %v376
  %v382 = vlaneseq
  %v383 = vshrl.u32 %v382, 7
  %v384 = vsub.s32 %v93, %v383
  %v385 = vrot.slane %v327, %v384
  %v386 = vsel %vm98, %v385, %v381
  %v387 = vlaneseq
  %v388 = vshrl.u32 %v387, 7
  %v389 = vsub.s32 %v74, %v388
  %v390 = vrot.slane %v334, %v389
  %v391 = vlaneseq
  %v392 = vshrl.u32 %v391, 7
  %v393 = vsub.s32 %v79, %v392
  %v394 = vrot.slane %v341, %v393
  %v395 = vsel %vm84, %v394, %v390
  %v396 = vlaneseq
  %v397 = vshrl.u32 %v396, 7
  %v398 = vsub.s32 %v86, %v397
  %v399 = vrot.slane %v348, %v398
  %v400 = vsel %vm91, %v399, %v395
  %v401 = vlaneseq
  %v402 = vshrl.u32 %v401, 7
  %v403 = vsub.s32 %v93, %v402
  %v404 = vrot.slane %v355, %v403
  %v405 = vsel %vm98, %v404, %v400
  %v406 = vsel %vm119, %v405, %v386
  %v407 = vsel %vm121, %v406, 0
  %v410 = vsel %vm121, %v356, 0
  %v413 = vsel %vm121, %v357, 0
  %v416 = vsel %vm121, %v358, 0
  %v419 = vsel %vm121, %v359, 0
  %421 = vmatprep.subr.mxu0 0.0
  %422 = vmatpush1.xpose.msra.mxu0 %v410
  %423 = vmatprep.subr.mxu0 0.0
  %424 = vmatpush1.xpose.msra.mxu0 %v413
  %425 = vmatprep.subr.mxu0 0.0
  %426 = vmatpush1.xpose.msra.mxu0 %v416
  %427 = vmatprep.subr.mxu0 0.0
  %428 = vmatpush1.xpose.msra.mxu0 %v419
  %429 = vmatprep.subr.mxu0 0.0
  %430 = vmatpush1.xpose.msra.mxu0 0.0
  %431 = vmatprep.subr.mxu0 0.0
  %432 = vmatpush1.xpose.msra.mxu0 0.0
  %433 = vmatprep.subr.mxu0 0.0
  %434 = vmatpush1.xpose.msra.mxu0 0.0
  %435 = vmatprep.subr.mxu0 0.0
  %436 = vmatpush1.xpose.msra.mxu0 0.0
  %437 = vmatprep.subr.mxu0 0.0
  %438 = vmatpush1.xpose.msra.mxu0 0.0
  %439 = vmatprep.subr.mxu0 0.0
  %440 = vmatpush1.xpose.msra.mxu0 0.0
  %441 = vmatprep.subr.mxu0 0.0
  %442 = vmatpush1.xpose.msra.mxu0 0.0
  %443 = vmatprep.subr.mxu0 0.0
  %444 = vmatpush1.xpose.msra.mxu0 0.0
  %445 = vmatprep.subr.mxu0 0.0
  %446 = vmatpush1.xpose.msra.mxu0 0.0
  %447 = vmatprep.subr.mxu0 0.0
  %448 = vmatpush1.xpose.msra.mxu0 0.0
  %449 = vmatprep.subr.mxu0 0.0
  %450 = vmatpush1.xpose.msra.mxu0 0.0
  %451 = vmatprep.subr.mxu0 0.0
  %452 = vmatpush1.xpose.msra.mxu0 0.0
  %453 = vmatprep.subr.mxu0 0.0
  %454 = vmatpush1.xpose.msra.mxu0 0.0
  %455 = vmatprep.subr.mxu0 0.0
  %456 = vmatpush1.xpose.msra.mxu0 0.0
  %457 = vmatprep.subr.mxu0 0.0
  %458 = vmatpush1.xpose.msra.mxu0 0.0
  %459 = vmatprep.subr.mxu0 0.0
  %460 = vmatpush1.xpose.msra.mxu0 0.0
  %461 = vmatprep.subr.mxu0 0.0
  %462 = vmatpush1.xpose.msra.mxu0 0.0
  %463 = vmatprep.subr.mxu0 0.0
  %464 = vmatpush1.xpose.msra.mxu0 0.0
  %465 = vmatprep.subr.mxu0 0.0
  %466 = vmatpush1.xpose.msra.mxu0 0.0
  %467 = vmatprep.subr.mxu0 0.0
  %468 = vmatpush1.xpose.msra.mxu0 0.0
  %469 = vmatprep.subr.mxu0 0.0
  %470 = vmatpush1.xpose.msra.mxu0 0.0
  %471 = vmatprep.subr.mxu0 0.0
  %472 = vmatpush1.xpose.msra.mxu0 0.0
  %473 = vmatprep.subr.mxu0 0.0
  %474 = vmatpush1.xpose.msra.mxu0 0.0
  %475 = vmatprep.subr.mxu0 0.0
  %476 = vmatpush1.xpose.msra.mxu0 0.0
  %477 = vmatprep.subr.mxu0 0.0
  %478 = vmatpush1.xpose.msra.mxu0 0.0
  %479 = vmatprep.subr.mxu0 0.0
  %480 = vmatpush1.xpose.msra.mxu0 0.0
  %481 = vmatprep.subr.mxu0 0.0
  %482 = vmatpush1.xpose.msra.mxu0 0.0
  %483 = vmatprep.subr.mxu0 0.0
  %484 = vmatpush1.xpose.msra.mxu0 0.0
  %485 = vmatprep.mubr.f32.mxu0 0.0
  %486 = vmatmul.mubr.f32.gmra.mrb[0].mxu0 %v407
  %v487 = vpop.f32.mrb[0].mxu0
  %v488 = vadd.f32 0.0, %v487
  %v489 = vpop.f32.mrb[0].mxu0
  %490 = vdwg.mxu0
  %vm491 = vcmp.le.f32.partialorder %v488, 1e-08
  %v492 = vsel %vm491, 1.0, %v488
  %v493 = vrcp.pop %v492
  %v494 = vmul.f32 1.0, %v493
  %v496 = vlaneseq
  %v497 = vshrl.u32 %v496, 7
  %v498 = vsub.s32 0, %v497
  %v499 = vrot.slane %v203, %v498
  %501 = vbcast.lane.b32.xlu0 %v499, 256
  %v502 = vpop.permute.xlu0 %501
  %s504 = sor.u32 256, 8
  %505 = vbcast.lane.b32.xlu0 %v499, %s504
  %v506 = vpop.permute.xlu0 %505
  %s508 = sor.u32 256, 16
  %509 = vbcast.lane.b32.xlu0 %v499, %s508
  %v510 = vpop.permute.xlu0 %509
  %s512 = sor.u32 256, 24
  %513 = vbcast.lane.b32.xlu0 %v499, %s512
  %v514 = vpop.permute.xlu0 %513
  %v515 = vlaneseq
  %v516 = vshrl.u32 %v515, 7
  %v517 = vsub.s32 1, %v516
  %v518 = vrot.slane %v203, %v517
  %520 = vbcast.lane.b32.xlu0 %v518, 256
  %v521 = vpop.permute.xlu0 %520
  %s523 = sor.u32 256, 8
  %524 = vbcast.lane.b32.xlu0 %v518, %s523
  %v525 = vpop.permute.xlu0 %524
  %s527 = sor.u32 256, 16
  %528 = vbcast.lane.b32.xlu0 %v518, %s527
  %v529 = vpop.permute.xlu0 %528
  %s531 = sor.u32 256, 24
  %532 = vbcast.lane.b32.xlu0 %v518, %s531
  %v533 = vpop.permute.xlu0 %532
  %v542 = vsub.f32 %v53, %v502
  %v543 = vsub.f32 %v54, %v506
  %v544 = vsub.f32 %v55, %v510
  %v545 = vsub.f32 %v56, %v514
  %v546 = vsub.f32 %v57, %v521
  %v547 = vsub.f32 %v58, %v525
  %v548 = vsub.f32 %v59, %v529
  %v549 = vsub.f32 %v60, %v533
  %v551 = vlaneseq
  %v552 = vshrl.u32 %v551, 7
  %v553 = vsub.s32 0, %v552
  %v554 = vrot.slane %v494, %v553
  %556 = vbcast.lane.b32.xlu0 %v554, 256
  %v557 = vpop.permute.xlu0 %556
  %s559 = sor.u32 256, 8
  %560 = vbcast.lane.b32.xlu0 %v554, %s559
  %v561 = vpop.permute.xlu0 %560
  %s563 = sor.u32 256, 16
  %564 = vbcast.lane.b32.xlu0 %v554, %s563
  %v565 = vpop.permute.xlu0 %564
  %s567 = sor.u32 256, 24
  %568 = vbcast.lane.b32.xlu0 %v554, %s567
  %v569 = vpop.permute.xlu0 %568
  %v570 = vlaneseq
  %v571 = vshrl.u32 %v570, 7
  %v572 = vsub.s32 1, %v571
  %v573 = vrot.slane %v494, %v572
  %575 = vbcast.lane.b32.xlu0 %v573, 256
  %v576 = vpop.permute.xlu0 %575
  %s578 = sor.u32 256, 8
  %579 = vbcast.lane.b32.xlu0 %v573, %s578
  %v580 = vpop.permute.xlu0 %579
  %s582 = sor.u32 256, 16
  %583 = vbcast.lane.b32.xlu0 %v573, %s582
  %v584 = vpop.permute.xlu0 %583
  %s586 = sor.u32 256, 24
  %587 = vbcast.lane.b32.xlu0 %v573, %s586
  %v588 = vpop.permute.xlu0 %587
  %v597 = vmul.f32 %v542, %v557
  %v598 = vmul.f32 %v543, %v561
  %v599 = vmul.f32 %v544, %v565
  %v600 = vmul.f32 %v545, %v569
  %v601 = vmul.f32 %v546, %v576
  %v602 = vmul.f32 %v547, %v580
  %v603 = vmul.f32 %v548, %v584
  %v604 = vmul.f32 %v549, %v588
  %v605 = vld [vmem:[%s3] sm:$0xff]
  %v606 = vld [vmem:[%s3 + $0x8] sm:$0xff]
  %v607 = vld [vmem:[%s3 + $0x10] sm:$0xff]
  %v608 = vld [vmem:[%s3 + $0x18] sm:$0xff]
  %v609 = vld [vmem:[%s4] sm:$0x1]
  %v611 = vlaneseq
  %v612 = vshrl.u32 %v611, 7
  %v613 = vsub.s32 0, %v612
  %v614 = vrot.slane %v609, %v613
  %624 = vset.pattern.permute.xlu0 0
  %625 = vperm.xlu0 %624, %v597
  %v626 = vpop.permute.xlu0 %625
  %627 = vset.pattern.permute.xlu0 0
  %628 = vperm.xlu0 %627, %v598
  %v629 = vpop.permute.xlu0 %628
  %630 = vset.pattern.permute.xlu0 0
  %631 = vperm.xlu0 %630, %v599
  %v632 = vpop.permute.xlu0 %631
  %633 = vset.pattern.permute.xlu0 0
  %634 = vperm.xlu0 %633, %v600
  %v635 = vpop.permute.xlu0 %634
  %636 = vset.pattern.permute.xlu0 0
  %637 = vperm.xlu0 %636, %v601
  %v638 = vpop.permute.xlu0 %637
  %639 = vset.pattern.permute.xlu0 0
  %640 = vperm.xlu0 %639, %v602
  %v641 = vpop.permute.xlu0 %640
  %642 = vset.pattern.permute.xlu0 0
  %643 = vperm.xlu0 %642, %v603
  %v644 = vpop.permute.xlu0 %643
  %645 = vset.pattern.permute.xlu0 0
  %646 = vperm.xlu0 %645, %v604
  %v647 = vpop.permute.xlu0 %646
  %v648 = vlaneseq
  %v649 = vshrl.u32 %v648, 7
  %v650 = vsub.s32 %v74, %v649
  %v651 = vrot.slane %v626, %v650
  %v652 = vlaneseq
  %v653 = vshrl.u32 %v652, 7
  %v654 = vsub.s32 %v79, %v653
  %v655 = vrot.slane %v629, %v654
  %v656 = vsel %vm84, %v655, %v651
  %v657 = vlaneseq
  %v658 = vshrl.u32 %v657, 7
  %v659 = vsub.s32 %v86, %v658
  %v660 = vrot.slane %v632, %v659
  %v661 = vsel %vm91, %v660, %v656
  %v662 = vlaneseq
  %v663 = vshrl.u32 %v662, 7
  %v664 = vsub.s32 %v93, %v663
  %v665 = vrot.slane %v635, %v664
  %v666 = vsel %vm98, %v665, %v661
  %v667 = vlaneseq
  %v668 = vshrl.u32 %v667, 7
  %v669 = vsub.s32 %v74, %v668
  %v670 = vrot.slane %v638, %v669
  %v671 = vlaneseq
  %v672 = vshrl.u32 %v671, 7
  %v673 = vsub.s32 %v79, %v672
  %v674 = vrot.slane %v641, %v673
  %v675 = vsel %vm84, %v674, %v670
  %v676 = vlaneseq
  %v677 = vshrl.u32 %v676, 7
  %v678 = vsub.s32 %v86, %v677
  %v679 = vrot.slane %v644, %v678
  %v680 = vsel %vm91, %v679, %v675
  %v681 = vlaneseq
  %v682 = vshrl.u32 %v681, 7
  %v683 = vsub.s32 %v93, %v682
  %v684 = vrot.slane %v647, %v683
  %v685 = vsel %vm98, %v684, %v680
  %v686 = vsel %vm119, %v685, %v666
  %v687 = vsel %vm121, %v686, 0
  %v690 = vsel %vm121, %v605, 0
  %v693 = vsel %vm121, %v606, 0
  %v696 = vsel %vm121, %v607, 0
  %v699 = vsel %vm121, %v608, 0
  %701 = vmatprep.subr.mxu0 0.0
  %702 = vmatpush1.xpose.msra.mxu0 %v690
  %703 = vmatprep.subr.mxu0 0.0
  %704 = vmatpush1.xpose.msra.mxu0 %v693
  %705 = vmatprep.subr.mxu0 0.0
  %706 = vmatpush1.xpose.msra.mxu0 %v696
  %707 = vmatprep.subr.mxu0 0.0
  %708 = vmatpush1.xpose.msra.mxu0 %v699
  %709 = vmatprep.subr.mxu0 0.0
  %710 = vmatpush1.xpose.msra.mxu0 0.0
  %711 = vmatprep.subr.mxu0 0.0
  %712 = vmatpush1.xpose.msra.mxu0 0.0
  %713 = vmatprep.subr.mxu0 0.0
  %714 = vmatpush1.xpose.msra.mxu0 0.0
  %715 = vmatprep.subr.mxu0 0.0
  %716 = vmatpush1.xpose.msra.mxu0 0.0
  %717 = vmatprep.subr.mxu0 0.0
  %718 = vmatpush1.xpose.msra.mxu0 0.0
  %719 = vmatprep.subr.mxu0 0.0
  %720 = vmatpush1.xpose.msra.mxu0 0.0
  %721 = vmatprep.subr.mxu0 0.0
  %722 = vmatpush1.xpose.msra.mxu0 0.0
  %723 = vmatprep.subr.mxu0 0.0
  %724 = vmatpush1.xpose.msra.mxu0 0.0
  %725 = vmatprep.subr.mxu0 0.0
  %726 = vmatpush1.xpose.msra.mxu0 0.0
  %727 = vmatprep.subr.mxu0 0.0
  %728 = vmatpush1.xpose.msra.mxu0 0.0
  %729 = vmatprep.subr.mxu0 0.0
  %730 = vmatpush1.xpose.msra.mxu0 0.0
  %731 = vmatprep.subr.mxu0 0.0
  %732 = vmatpush1.xpose.msra.mxu0 0.0
  %733 = vmatprep.subr.mxu0 0.0
  %734 = vmatpush1.xpose.msra.mxu0 0.0
  %735 = vmatprep.subr.mxu0 0.0
  %736 = vmatpush1.xpose.msra.mxu0 0.0
  %737 = vmatprep.subr.mxu0 0.0
  %738 = vmatpush1.xpose.msra.mxu0 0.0
  %739 = vmatprep.subr.mxu0 0.0
  %740 = vmatpush1.xpose.msra.mxu0 0.0
  %741 = vmatprep.subr.mxu0 0.0
  %742 = vmatpush1.xpose.msra.mxu0 0.0
  %743 = vmatprep.subr.mxu0 0.0
  %744 = vmatpush1.xpose.msra.mxu0 0.0
  %745 = vmatprep.subr.mxu0 0.0
  %746 = vmatpush1.xpose.msra.mxu0 0.0
  %747 = vmatprep.subr.mxu0 0.0
  %748 = vmatpush1.xpose.msra.mxu0 0.0
  %749 = vmatprep.subr.mxu0 0.0
  %750 = vmatpush1.xpose.msra.mxu0 0.0
  %751 = vmatprep.subr.mxu0 0.0
  %752 = vmatpush1.xpose.msra.mxu0 0.0
  %753 = vmatprep.subr.mxu0 0.0
  %754 = vmatpush1.xpose.msra.mxu0 0.0
  %755 = vmatprep.subr.mxu0 0.0
  %756 = vmatpush1.xpose.msra.mxu0 0.0
  %757 = vmatprep.subr.mxu0 0.0
  %758 = vmatpush1.xpose.msra.mxu0 0.0
  %759 = vmatprep.subr.mxu0 0.0
  %760 = vmatpush1.xpose.msra.mxu0 0.0
  %761 = vmatprep.subr.mxu0 0.0
  %762 = vmatpush1.xpose.msra.mxu0 0.0
  %763 = vmatprep.subr.mxu0 0.0
  %764 = vmatpush1.xpose.msra.mxu0 0.0
  %765 = vmatprep.mubr.f32.mxu0 0.0
  %766 = vmatmul.mubr.f32.gmra.mrb[0].mxu0 %v687
  %v767 = vpop.f32.mrb[0].mxu0
  %v768 = vadd.f32 %v614, %v767
  %v769 = vpop.f32.mrb[0].mxu0
  %770 = vdwg.mxu0
  %v771 = vxor.u32 %v768, 2147483648
  %v772 = vmul.f32 %v771, 1.442695
  %v773 = vpow.pop %v772
  %v774 = vadd.f32 %v773, 1.0
  %v775 = vrcp.pop %v774
  %v776 = vmul.f32 1.0, %v775
  %v777 = vmul.f32 %v776, %v494
  %v778 = vsub.f32 0.0, %v203
  %v779 = vmul.f32 %v778, %v777
  %v780 = vlaneseq
  %v781 = vshrl.u32 %v780, 7
  %v782 = vsub.s32 0, %v781
  %v783 = vrot.slane %v777, %v782
  %785 = vbcast.lane.b32.xlu0 %v783, 256
  %v786 = vpop.permute.xlu0 %785
  %s788 = sor.u32 256, 8
  %789 = vbcast.lane.b32.xlu0 %v783, %s788
  %v790 = vpop.permute.xlu0 %789
  %s792 = sor.u32 256, 16
  %793 = vbcast.lane.b32.xlu0 %v783, %s792
  %v794 = vpop.permute.xlu0 %793
  %s796 = sor.u32 256, 24
  %797 = vbcast.lane.b32.xlu0 %v783, %s796
  %v798 = vpop.permute.xlu0 %797
  %v799 = vlaneseq
  %v800 = vshrl.u32 %v799, 7
  %v801 = vsub.s32 1, %v800
  %v802 = vrot.slane %v777, %v801
  %804 = vbcast.lane.b32.xlu0 %v802, 256
  %v805 = vpop.permute.xlu0 %804
  %s807 = sor.u32 256, 8
  %808 = vbcast.lane.b32.xlu0 %v802, %s807
  %v809 = vpop.permute.xlu0 %808
  %s811 = sor.u32 256, 16
  %812 = vbcast.lane.b32.xlu0 %v802, %s811
  %v813 = vpop.permute.xlu0 %812
  %s815 = sor.u32 256, 24
  %816 = vbcast.lane.b32.xlu0 %v802, %s815
  %v817 = vpop.permute.xlu0 %816
  %v818 = vmul.f32 %v20, %v786
  %v819 = vmul.f32 %v21, %v790
  %v820 = vmul.f32 %v22, %v794
  %v821 = vmul.f32 %v23, %v798
  %v822 = vmul.f32 %v24, %v805
  %v823 = vmul.f32 %v25, %v809
  %v824 = vmul.f32 %v26, %v813
  %v825 = vmul.f32 %v27, %v817
  %v826 = vlaneseq
  %v827 = vshrl.u32 %v826, 7
  %v828 = vsub.s32 0, %v827
  %v829 = vrot.slane %v779, %v828
  %831 = vbcast.lane.b32.xlu0 %v829, 256
  %v832 = vpop.permute.xlu0 %831
  %s834 = sor.u32 256, 8
  %835 = vbcast.lane.b32.xlu0 %v829, %s834
  %v836 = vpop.permute.xlu0 %835
  %s838 = sor.u32 256, 16
  %839 = vbcast.lane.b32.xlu0 %v829, %s838
  %v840 = vpop.permute.xlu0 %839
  %s842 = sor.u32 256, 24
  %843 = vbcast.lane.b32.xlu0 %v829, %s842
  %v844 = vpop.permute.xlu0 %843
  %v845 = vlaneseq
  %v846 = vshrl.u32 %v845, 7
  %v847 = vsub.s32 1, %v846
  %v848 = vrot.slane %v779, %v847
  %850 = vbcast.lane.b32.xlu0 %v848, 256
  %v851 = vpop.permute.xlu0 %850
  %s853 = sor.u32 256, 8
  %854 = vbcast.lane.b32.xlu0 %v848, %s853
  %v855 = vpop.permute.xlu0 %854
  %s857 = sor.u32 256, 16
  %858 = vbcast.lane.b32.xlu0 %v848, %s857
  %v859 = vpop.permute.xlu0 %858
  %s861 = sor.u32 256, 24
  %862 = vbcast.lane.b32.xlu0 %v848, %s861
  %v863 = vpop.permute.xlu0 %862
  %v864 = vadd.f32 %v818, %v832
  %v865 = vadd.f32 %v819, %v836
  %v866 = vadd.f32 %v820, %v840
  %v867 = vadd.f32 %v821, %v844
  %v868 = vadd.f32 %v822, %v851
  %v869 = vadd.f32 %v823, %v855
  %v870 = vadd.f32 %v824, %v859
  %v871 = vadd.f32 %v825, %v863
  %872 = vst.msk [vmem:[%s5] sm:$0xff] %vm28, %v864
  %873 = vst.msk [vmem:[%s5 + $0x8] sm:$0xff] %vm28, %v865
  %874 = vst.msk [vmem:[%s5 + $0x10] sm:$0xff] %vm28, %v866
  %875 = vst.msk [vmem:[%s5 + $0x18] sm:$0xff] %vm28, %v867
  %876 = vst.msk [vmem:[%s5 + $0x20] sm:$0xff] %vm28, %v868
  %877 = vst.msk [vmem:[%s5 + $0x28] sm:$0xff] %vm28, %v869
  %878 = vst.msk [vmem:[%s5 + $0x30] sm:$0xff] %vm28, %v870
  %879 = vst.msk [vmem:[%s5 + $0x38] sm:$0xff] %vm28, %v871
  // Predicated region
  $region22: #{tpu_custom_call.1} parent=0 // pred_check
    _
  $region23: #{tpu_custom_call.1} parent=0 // pred_check_branch
    %881 = sbr.rel (0) target = $region25
  $region24: #{tpu_custom_call.1} parent=0 // pred_region
    _
  $region25: #{tpu_custom_call.1} parent=0 // pred_fallthru
    _
  // Predicated region
  $region26: #{tpu_custom_call.1} parent=0 // pred_check
    _
  $region27: #{tpu_custom_call.1} parent=0 // pred_check_branch
    %883 = sbr.rel (0) target = $region29
  $region28: #{tpu_custom_call.1} parent=0 // pred_region
    _
  $region29: #{tpu_custom_call.1} parent=0 // pred_fallthru
    _

</llo_original>
